<compile_context>
chip_gen: v5e
topology: v5e:2x2
jax: 0.10.0
libtpu: 0.0.40
codegen_flags: <defaults>
</compile_context>

<pallas_src>
import jax
import jax.numpy as jnp
from jax import lax
from jax.experimental import pallas as pl
from jax.experimental.pallas import tpu as pltpu


def _round_up(n: int, m: int) -> int:
    return ((n + m - 1) // m) * m


def _classifier_kernel(x_ref, w_ref, b_ref, o_ref):
    # x_ref: (TILE_B, F), w_ref: (1, F), b_ref: (1,) f32 in SMEM,
    # o_ref: (1, TILE_B) f32  (p_up, batch on lanes).
    # z = w_diff @ x^T  -> (1, TILE_B); contraction over F on both operands.
    z = lax.dot_general(
        w_ref[...], x_ref[...],
        dimension_numbers=(((1,), (1,)), ((), ())),
        preferred_element_type=jnp.float32,
    ) + b_ref[0]
    # p_up = sigmoid(z); exp + approx reciprocal go to the otherwise-idle EUP.
    o_ref[...] = pl.reciprocal(1.0 + jnp.exp(-z), approx=True)


def binary_classifier_forward(x, w, b, *, tile_b: int | None = None):
    """x: [B, F], w: [F, 2], b: [1, 2] -> [B, 2] = [p_up, p_down]."""
    B, F = x.shape
    assert w.shape == (F, 2) and b.shape == (1, 2)

    # Fold the 2-class head into a single logit difference (wrapper-side, tiny).
    w_diff = (w[:, 0] - w[:, 1]).reshape(1, F).astype(x.dtype)   # (1, F)
    b_diff = (b[0, 0] - b[0, 1]).reshape(1).astype(jnp.float32)  # (1,)

    # Batch tile: multiple of 128 (lane-dense output blocks).  Size it from the
    # lane-padded VMEM footprint (last dim pads to 128 lanes in VMEM) with a
    # ~4 MiB per-buffer budget => ~8 MiB double-buffered, safely under the
    # default scoped-VMEM limit on every chip, while per-step HBM traffic stays
    # large relative to the ~0.35 us grid-step overhead.
    itemsize = jnp.dtype(x.dtype).itemsize
    lanes_f = _round_up(F, 128)
    if tile_b is None:
        budget_bytes = 4 * 1024 * 1024
        tile_b = (budget_bytes // (lanes_f * itemsize)) // 128 * 128
        tile_b = min(max(tile_b, 128), 16384)
    # Don't over-tile tiny batches.
    tile_b = max(128, min(tile_b, _round_up(B, 128)))

    num_tiles = (B + tile_b - 1) // tile_b
    out_cols = num_tiles * tile_b  # padded output => every store is a full block

    p_up = pl.pallas_call(
        _classifier_kernel,
        out_shape=jax.ShapeDtypeStruct((1, out_cols), jnp.float32),
        grid=(num_tiles,),
        in_specs=[
            pl.BlockSpec((tile_b, F), lambda i: (i, 0)),          # streamed x tiles
            pl.BlockSpec((1, F), lambda i: (0, 0)),               # resident w_diff
            pl.BlockSpec(memory_space=pltpu.MemorySpace.SMEM),    # b_diff scalar
        ],
        out_specs=pl.BlockSpec((1, tile_b), lambda i: (0, i)),    # lane-dense p_up
        compiler_params=pltpu.CompilerParams(
            dimension_semantics=("parallel",),                    # 2 TCs on v7x
        ),
    )(x, w_diff, b_diff)

    p_up = p_up[0, :B]
    return jnp.stack([p_up, 1.0 - p_up], axis=-1)        # (B, 2) = [p_up, p_down]


if __name__ == "__main__":
    key = jax.random.PRNGKey(0)
    kx, kw, kb = jax.random.split(key, 3)

    B, F = 2, 32                        # small shapes: batch=2, features=32
    x = jax.random.normal(kx, (B, F), dtype=jnp.float32)
    # Deterministic synthetic parameters (no checkpoint load).
    w = jax.random.normal(kw, (F, 2), dtype=jnp.float32) * 0.1
    b = jax.random.normal(kb, (1, 2), dtype=jnp.float32) * 0.1

    probs = binary_classifier_forward(x, w, b)
    probs = jax.block_until_ready(probs)

    # Reference: full f32 2-class softmax (algebraically identical to the
    # sigmoid-of-difference used in the kernel).
    ref = jax.nn.softmax(x @ w + b, axis=-1)
    assert probs.shape == (B, 2)
    assert jnp.allclose(probs, ref, atol=1e-2, rtol=1e-2)
    assert jnp.allclose(jnp.sum(probs, axis=-1), 1.0, atol=1e-5)

    print("KERNEL_OK")
</pallas_src>

<mosaic_0001>
module attributes {stable_mosaic.version = 11 : i64} {
  func.func @_classifier_kernel(%arg0: i32, %arg1: memref<128x32xf32, #tpu.memory_space<vmem>>, %arg2: memref<1x32xf32, #tpu.memory_space<vmem>>, %arg3: memref<1xf32, #tpu.memory_space<smem>>, %arg4: memref<1x128xf32, #tpu.memory_space<vmem>>) attributes {dimension_semantics = [#tpu.dimension_semantics<parallel>], iteration_bounds = array<i64: 1>, scalar_prefetch = 0 : i64, scratch_operands = 0 : i64, tpu.core_type = #tpu.core_type<tc>, window_params = [{transform_indices = @transform_0, window_bounds = array<i64: 128, 32>}, {pipeline_mode = #tpu.pipeline_mode<synchronous>, transform_indices = @transform_1, window_bounds = array<i64: 1, 32>}, {transform_indices = @transform_2, window_bounds = array<i64: 1>}, {transform_indices = @transform_3, window_bounds = array<i64: 1, 128>}]} {
    %c0 = arith.constant 0 : index
    %c0_0 = arith.constant 0 : index
    %0 = vector.load %arg2[%c0, %c0_0] : memref<1x32xf32, #tpu.memory_space<vmem>>, vector<1x32xf32>
    %c0_1 = arith.constant 0 : index
    %c0_2 = arith.constant 0 : index
    %1 = vector.load %arg1[%c0_1, %c0_2] : memref<128x32xf32, #tpu.memory_space<vmem>>, vector<128x32xf32>
    %cst = arith.constant dense<0.000000e+00> : vector<1x128xf32>
    %2 = tpu.matmul %0, %1, %cst {dimension_numbers = #tpu.dot_dimension_numbers<[1], [1], [0], [0], [0, 0, 1, 0], [], []>} : vector<1x32xf32>, vector<128x32xf32>, vector<1x128xf32> -> vector<1x128xf32>
    %c0_3 = arith.constant 0 : index
    %3 = memref.load %arg3[%c0_3] : memref<1xf32, #tpu.memory_space<smem>>
    %4 = vector.broadcast %3 : f32 to vector<1x128xf32>
    %5 = arith.addf %2, %4 : vector<1x128xf32>
    %cst_4 = arith.constant 0.000000e+00 : f32
    %6 = vector.broadcast %cst_4 : f32 to vector<1x128xf32>
    %7 = arith.subf %6, %5 : vector<1x128xf32>
    %8 = math.exp %7 : vector<1x128xf32>
    %cst_5 = arith.constant 1.000000e+00 : f32
    %9 = vector.broadcast %cst_5 : f32 to vector<1x128xf32>
    %10 = arith.addf %9, %8 : vector<1x128xf32>
    %11 = tpu.reciprocal %10 {approx = true} : vector<1x128xf32> -> vector<1x128xf32>
    %c0_6 = arith.constant 0 : index
    %c0_7 = arith.constant 0 : index
    %12 = vector.load %arg4[%c0_6, %c0_7] : memref<1x128xf32, #tpu.memory_space<vmem>>, vector<1x128xf32>
    tpu.vector_store %arg4[%c0_6, %c0_7], %11 {strides = array<i32>} : memref<1x128xf32, #tpu.memory_space<vmem>>, vector<1x128xf32>,
    return
  }
  func.func @transform_0(%arg0: i32) -> (i32, i32) {
    %c0_i32 = arith.constant 0 : i32
    %c0_i32_0 = arith.constant 0 : i32
    return %arg0, %c0_i32 : i32, i32
  }
  func.func @transform_1(%arg0: i32) -> (i32, i32) {
    %c0_i32 = arith.constant 0 : i32
    %c0_i32_0 = arith.constant 0 : i32
    %c0_i32_1 = arith.constant 0 : i32
    return %c0_i32, %c0_i32_0 : i32, i32
  }
  func.func @transform_2(%arg0: i32) -> i32 {
    %c0_i32 = arith.constant 0 : i32
    %c0_i32_0 = arith.constant 0 : i32
    return %c0_i32 : i32
  }
  func.func @transform_3(%arg0: i32) -> (i32, i32) {
    %c0_i32 = arith.constant 0 : i32
    %c0_i32_0 = arith.constant 0 : i32
    return %c0_i32, %arg0 : i32, i32
  }
}

</mosaic_0001>

<llo_original>
// kernel: tpu_custom_call.1
$region0: #{tpu_custom_call.1}
  #allocation0 [shape = 'u32[]', space=smem, size = 0x4, offset = 0x4, fixed_abs, tag = 'smem constant byte address 0x4 - core index']
  #allocation1 [shape = 'u32[72,128]{1,0:T(1,128)}', space=vmem, size = 0x9000, scoped, tag = 'internal scratch']
  #allocation2 [shape = 'f32[1]{0:T(128)S(6)}', space=smem, size = 0x200, scoped, tag = 'scoped memory for tpu_custom_call.1']
  %s0 = inlined_call_operand.vmem [shape: f32[2,32], index: 0, kind: input, shape index: {}]
  %s1 = inlined_call_operand.hbm [shape: f32[1,32], index: 1, kind: input, shape index: {}]
  %s2 = inlined_call_operand.<no memory space> [shape: f32[1], index: 2, kind: input, shape index: {}]
  %s3 = inlined_call_operand.hbm [shape: f32[1,128], index: 3, kind: output, shape index: {}]
  %s4 = sld [smem:[#allocation0]]
  $region26: #{tpu_custom_call.1} parent=0
    _
  %s6 = ssub.s32 1, %s4
  %s7 = scalar_select 0, %s6, %s4
  %8 = sst [smem:[#allocation2]] %s2
  $region1: #{tpu_custom_call.1} parent=0
    #allocation3 [shape = 'u8[512]{0}', space=vmem, size = 0x400, scoped, tag = 'input window, operand 1, single buffered']
    #allocation4 [shape = 's32[1]{0}', space=sflag, size = 0x4, scoped, tag = 'scoped memory for tpu_custom_call.1']
    #allocation5 [shape = 's32[1]{0}', space=sflag, size = 0x4, scoped, tag = 'scoped memory for tpu_custom_call.1']
    #allocation6 [shape = 'u8[512]{0}', space=vmem, size = 0x400, scoped, tag = 'output window, operand 0, single buffered']
    %9 = vsyncpa [#allocation4], 0
    %10 = vsyncpa [#allocation5], 0
    // Predicated region
    $region2: #{tpu_custom_call.1} parent=1 // pred_check
      _
    $region3: #{tpu_custom_call.1} parent=1 // pred_check_branch
      %12 = sbr.rel (0) target = $region5
    $region4: #{tpu_custom_call.1} parent=1 // pred_region
      _
    $region5: #{tpu_custom_call.1} parent=1 // pred_fallthru
      _
    // Predicated region
    $region6: #{tpu_custom_call.1} parent=1 // pred_check
      _
    $region7: #{tpu_custom_call.1} parent=1 // pred_check_branch
      %14 = sbr.rel (0) target = $region9
    $region8: #{tpu_custom_call.1} parent=1 // pred_region
      %16 = vsyncadd [#allocation4], 0
      %s18 = sshll.u32 %s1, 4
      %s19 = int_to_ptr.hbm [resolvable:$true] %s18
      %s20 = sshll.u32 [#allocation3], 4
      %s21 = int_to_ptr.vmem [resolvable:$true] %s20
      %23 = dma.hbm_to_vmem [thread:$0]  %s19, 16, %s21, [#allocation4]
    $region9: #{tpu_custom_call.1} parent=1 // pred_fallthru
      _
    // Predicated region
    $region10: #{tpu_custom_call.1} parent=1 // pred_check
      _
    $region11: #{tpu_custom_call.1} parent=1 // pred_check_branch
      %25 = sbr.rel (0) target = $region13
    $region12: #{tpu_custom_call.1} parent=1 // pred_region
      _
    $region13: #{tpu_custom_call.1} parent=1 // pred_fallthru
      _
    // Predicated region
    $region14: #{tpu_custom_call.1} parent=1 // pred_check
      _
    $region15: #{tpu_custom_call.1} parent=1 // pred_check_branch
      %27 = sbr.rel (0) target = $region17
    $region16: #{tpu_custom_call.1} parent=1 // pred_region
      %29 = dma.done [#allocation4], 16
    $region17: #{tpu_custom_call.1} parent=1 // pred_fallthru
      _
    %v30 = vld [vmem:[#allocation3] sm:$0x1]
    %v31 = vld [vmem:[%s0] sm:$0xff]
    %v32 = vld [vmem:[%s0 + $0x8] sm:$0xff]
    %v33 = vld [vmem:[%s0 + $0x10] sm:$0xff]
    %v34 = vld [vmem:[%s0 + $0x18] sm:$0xff]
    %v35 = vld [vmem:[%s0 + $0x20] sm:$0xff]
    %v36 = vld [vmem:[%s0 + $0x28] sm:$0xff]
    %v37 = vld [vmem:[%s0 + $0x30] sm:$0xff]
    %v38 = vld [vmem:[%s0 + $0x38] sm:$0xff]
    %v39 = vld [vmem:[%s0 + $0x40] sm:$0xff]
    %v40 = vld [vmem:[%s0 + $0x48] sm:$0xff]
    %v41 = vld [vmem:[%s0 + $0x50] sm:$0xff]
    %v42 = vld [vmem:[%s0 + $0x58] sm:$0xff]
    %v43 = vld [vmem:[%s0 + $0x60] sm:$0xff]
    %v44 = vld [vmem:[%s0 + $0x68] sm:$0xff]
    %v45 = vld [vmem:[%s0 + $0x70] sm:$0xff]
    %v46 = vld [vmem:[%s0 + $0x78] sm:$0xff]
    %s47 = sld [smem:[#allocation2]]
    %v48 = vstv %s47
    %vm49 = vcmask 261120
    %v51 = vsel %vm49, %v30, 0
    %v54 = vsel %vm49, %v31, 0
    %v57 = vsel %vm49, %v32, 0
    %v60 = vsel %vm49, %v33, 0
    %v63 = vsel %vm49, %v34, 0
    %v66 = vsel %vm49, %v35, 0
    %v69 = vsel %vm49, %v36, 0
    %v72 = vsel %vm49, %v37, 0
    %v75 = vsel %vm49, %v38, 0
    %v78 = vsel %vm49, %v39, 0
    %v81 = vsel %vm49, %v40, 0
    %v84 = vsel %vm49, %v41, 0
    %v87 = vsel %vm49, %v42, 0
    %v90 = vsel %vm49, %v43, 0
    %v93 = vsel %vm49, %v44, 0
    %v96 = vsel %vm49, %v45, 0
    %v99 = vsel %vm49, %v46, 0
    %101 = vmatpush.xpose.msra.mxu0 %v99
    %102 = vmatpush.xpose.msra.mxu0 %v96
    %103 = vmatpush.xpose.msra.mxu0 %v93
    %104 = vmatpush.xpose.msra.mxu0 %v90
    %105 = vmatpush.xpose.msra.mxu0 %v87
    %106 = vmatpush.xpose.msra.mxu0 %v84
    %107 = vmatpush.xpose.msra.mxu0 %v81
    %108 = vmatpush.xpose.msra.mxu0 %v78
    %109 = vmatpush.xpose.msra.mxu0 %v75
    %110 = vmatpush.xpose.msra.mxu0 %v72
    %111 = vmatpush.xpose.msra.mxu0 %v69
    %112 = vmatpush.xpose.msra.mxu0 %v66
    %113 = vmatpush.xpose.msra.mxu0 %v63
    %114 = vmatpush.xpose.msra.mxu0 %v60
    %115 = vmatpush.xpose.msra.mxu0 %v57
    %116 = vmatpush.xpose.msra.mxu0 %v54
    %117 = vmatmul.f32.gmra.mxu0 %v51
    %v118 = vpop.f32.mrf.mxu0
    %v119 = vadd.f32 %v48, %v118
    %120 = vdwg.mxu0
    %v121 = vsub.f32 0.0, %v119
    %v122 = vmul.f32 %v121, 1.442695
    %v123 = vpow.pop %v122
    %v124 = vadd.f32 %v123, 1.0
    %v125 = vrcp.pop %v124
    %126 = vst [vmem:[#allocation6] sm:$0x1] %v125
    // Predicated region
    $region18: #{tpu_custom_call.1} parent=1 // pred_check
      _
    $region19: #{tpu_custom_call.1} parent=1 // pred_check_branch
      %128 = sbr.rel (0) target = $region21
    $region20: #{tpu_custom_call.1} parent=1 // pred_region
      %130 = vsyncadd [#allocation5], 0
      %s132 = sshll.u32 [#allocation6], 4
      %s133 = int_to_ptr.vmem [resolvable:$true] %s132
      %s134 = sshll.u32 %s3, 4
      %s135 = int_to_ptr.hbm [resolvable:$true] %s134
      %137 = dma.vmem_to_hbm [thread:$0]  %s133, 16, %s135, [#allocation5]
    $region21: #{tpu_custom_call.1} parent=1 // pred_fallthru
      _
    // Predicated region
    $region22: #{tpu_custom_call.1} parent=1 // pred_check
      _
    $region23: #{tpu_custom_call.1} parent=1 // pred_check_branch
      %139 = sbr.rel (0) target = $region25
    $region24: #{tpu_custom_call.1} parent=1 // pred_region
      %141 = dma.done [#allocation5], 16
    $region25: #{tpu_custom_call.1} parent=1 // pred_fallthru
      _
    %142 = vsyncpa [#allocation4], 1
    %143 = vsyncpa [#allocation5], 1

</llo_original>
